<compile_context>
chip_gen: v5e
topology: v5e:2x2
jax: 0.10.0
libtpu: 0.0.40
codegen_flags: <defaults>
</compile_context>

<pallas_src>
import functools

import jax
import jax.numpy as jnp
from jax import lax
from jax.experimental import pallas as pl
from jax.experimental.pallas import tpu as pltpu


def _attention_kernel(x_ref, m_ref, o_ref, *, tq):
    # x_ref : (1, C, N)      feature pixels for this batch element, channels-first
    #                        (N on lanes -> dense loads).
    # m_ref : (1, C, C)      folded bilinear form for this head: M_h = scale * Wq_h @ Wk_h^T
    # o_ref : (1, 1, tq, N)  attention rows [q0, q0+tq) for (batch, head) -- lane-dense.
    q0 = pl.multiple_of(pl.program_id(2) * tq, tq)

    x_k = x_ref[0]                                                    # (C, N)  all key pixels
    x_q = x_ref[0, :, pl.ds(q0, tq)]                                  # (C, tq) query pixels

    # t = M_h @ x  -> (C, N);  sim = x_q^T @ t -> (tq, N)   (q_i . k_j, already scaled)
    t = jnp.dot(m_ref[0], x_k, preferred_element_type=jnp.float32)    # (C, N)
    sim = lax.dot_general(
        x_q, t,
        dimension_numbers=(((0,), (0,)), ((), ())),
        preferred_element_type=jnp.float32)                           # (tq, N)

    # numerically-stable softmax over the key axis (matches torch.softmax(dim=-1))
    row_max = jnp.max(sim, axis=-1, keepdims=True)
    p = jnp.exp(sim - row_max)
    denom = jnp.sum(p, axis=-1, keepdims=True)
    r = pl.reciprocal(denom, approx=True)                             # EUP slot
    r = r * (2.0 - denom * r)                                         # one Newton step -> f32-exact
    o_ref[0, 0] = (p * r).astype(o_ref.dtype)                         # single unmasked store


def _pick_query_tile(n, max_block_bytes=4 << 20):
    """Largest power-of-two multiple of 8 dividing n whose (tq, n) f32 block stays
    <= max_block_bytes, so ~8 live copies (double-buffered output + softmax
    intermediates) fit comfortably under v7x's 64 MiB VMEM."""
    if n % 8 != 0:
        return n                      # fall back to a full-extent block
    best = 8
    t = 8
    while t <= n:
        if n % t == 0 and t * n * 4 <= max_block_bytes:
            best = t
        t *= 2
    return best


def attention_pallas(fmap, w_qk, *, heads, dim_head, operand_dtype=jnp.float32):
    """fmap: (b, c, h, w) float32 (NCHW, as in PyTorch).
    w_qk: (2*heads*dim_head, c, 1, 1) -- the Conv2d(dim, inner_dim*2, 1, bias=False) weight.
    Returns attn: (b, heads, h*w, h*w) float32."""
    b, c, h, w = fmap.shape
    n = h * w
    inner = heads * dim_head
    scale = dim_head ** (-0.5)

    # NCHW -> (b, C, N): pure reshape, no HBM transpose pass (pixel index = x*w + y,
    # matching 'b h (x y) (u v)').
    x = fmap.reshape(b, c, n).astype(operand_dtype)

    # Fold 1x1 conv + scale + QK^T into per-head (C, C) bilinear forms (f32 accumulate).
    # Conv weight rows are output channels ordered [q(head0 d0..), ..., | k(...)].
    w2 = w_qk.reshape(2 * inner, c).astype(jnp.float32)
    wq = w2[:inner].reshape(heads, dim_head, c)          # (H, D, C)
    wk = w2[inner:].reshape(heads, dim_head, c)          # (H, D, C)
    m = (scale * jnp.einsum('hdc,hde->hce', wq, wk)).astype(operand_dtype)   # (H, C, C)

    tq = _pick_query_tile(n)
    grid = (b, heads, n // tq)

    # VMEM budget: double-buffered output block + double-buffered x block + live
    # f32 softmax intermediates.  Kept under 60 MiB so it also fits v7x.
    out_block_bytes = tq * n * 4
    x_block_bytes = c * n * jnp.dtype(operand_dtype).itemsize
    vmem_limit = int(min(
        60 * 1024 * 1024,
        max(32 * 1024 * 1024, 8 * out_block_bytes + 2 * x_block_bytes)))

    kernel = functools.partial(_attention_kernel, tq=tq)

    return pl.pallas_call(
        kernel,
        out_shape=jax.ShapeDtypeStruct((b, heads, n, n), jnp.float32),
        grid_spec=pltpu.PrefetchScalarGridSpec(
            num_scalar_prefetch=0,
            grid=grid,
            in_specs=[
                pl.BlockSpec((1, c, n), lambda bi, hi, qi: (bi, 0, 0)),
                pl.BlockSpec((1, c, c), lambda bi, hi, qi: (hi, 0, 0)),
            ],
            out_specs=pl.BlockSpec((1, 1, tq, n),
                                   lambda bi, hi, qi: (bi, hi, qi, 0)),
        ),
        compiler_params=pltpu.CompilerParams(
            dimension_semantics=("parallel", "parallel", "parallel"),
            vmem_limit_bytes=vmem_limit),
    )(x, m)


def attention_ref(fmap, w_qk, *, heads, dim_head):
    """Plain-JAX reference mirroring the PyTorch forward pass."""
    b, c, h, w = fmap.shape
    inner = heads * dim_head
    scale = dim_head ** (-0.5)
    wmat = w_qk.reshape(2 * inner, c)
    qk = jnp.einsum('bchw,oc->bohw', fmap, wmat)            # 1x1 conv, no bias
    q, k = qk[:, :inner], qk[:, inner:]

    def split_heads(t):  # (b, heads*d, h, w) -> (b, heads, h, w, d)
        return t.reshape(b, heads, dim_head, h, w).transpose(0, 1, 3, 4, 2)

    q = split_heads(q) * scale
    k = split_heads(k)
    sim = jnp.einsum('bhxyd,bhuvd->bhxyuv', q, k)
    sim = sim.reshape(b, heads, h * w, h * w)
    return jax.nn.softmax(sim, axis=-1)


if __name__ == "__main__":
    # Small shapes consistent with Attention(dim=4, heads=4, dim_head=128);
    # 16x16 fmap -> N = 256 (multiple of 128) so output stores are lane-dense.
    b, dim, h, w = 2, 4, 16, 16
    heads, dim_head = 4, 128
    inner = heads * dim_head

    key = jax.random.PRNGKey(0)
    k_fmap, k_w = jax.random.split(key)
    fmap = jax.random.normal(k_fmap, (b, dim, h, w), dtype=jnp.float32)
    # Conv2d(dim, inner_dim*2, 1, bias=False) weight: (2*inner, dim, 1, 1)
    w_qk = (jax.random.normal(k_w, (2 * inner, dim, 1, 1), dtype=jnp.float32)
            * (1.0 / jnp.sqrt(dim)))

    attn = attention_pallas(fmap, w_qk, heads=heads, dim_head=dim_head)
    attn = jax.block_until_ready(attn)

    ref = attention_ref(fmap, w_qk, heads=heads, dim_head=dim_head)
    assert attn.shape == (b, heads, h * w, h * w)
    # Tolerance absorbs the M = scale*Wq@Wk^T re-association (different f32
    # summation order vs the reference q/k path).
    assert jnp.allclose(attn, ref, atol=1e-3, rtol=1e-3), float(jnp.max(jnp.abs(attn - ref)))

    print("KERNEL_OK")
</pallas_src>

<mosaic_0001>
module attributes {stable_mosaic.version = 11 : i64} {
  func.func @_attention_kernel(%arg0: i32, %arg1: i32, %arg2: i32, %arg3: memref<1x4x256xf32, #tpu.memory_space<vmem>>, %arg4: memref<1x4x4xf32, #tpu.memory_space<vmem>>, %arg5: memref<1x1x256x256xf32, #tpu.memory_space<vmem>>) attributes {dimension_semantics = [#tpu.dimension_semantics<parallel>, #tpu.dimension_semantics<parallel>, #tpu.dimension_semantics<parallel>], iteration_bounds = array<i64: 2, 4, 1>, scalar_prefetch = 0 : i64, scratch_operands = 0 : i64, tpu.core_type = #tpu.core_type<tc>, window_params = [{transform_indices = @transform_0, window_bounds = array<i64: 1, 4, 256>}, {transform_indices = @transform_1, window_bounds = array<i64: 1, 4, 4>}, {transform_indices = @transform_2, window_bounds = array<i64: 1, 1, 256, 256>}]} {
    %c256_i32 = arith.constant 256 : i32
    %0 = arith.muli %arg2, %c256_i32 : i32
    %1 = tpu.assume_multiple %0, 256 : i32
    %c0 = arith.constant 0 : index
    %c0_0 = arith.constant 0 : index
    %c0_1 = arith.constant 0 : index
    %2 = vector.load %arg3[%c0, %c0_0, %c0_1] : memref<1x4x256xf32, #tpu.memory_space<vmem>>, vector<1x4x256xf32>
    %3 = vector.shape_cast %2 : vector<1x4x256xf32> to vector<4x256xf32>
    %c0_2 = arith.constant 0 : index
    %c0_3 = arith.constant 0 : index
    %4 = arith.index_cast %1 : i32 to index
    %5 = vector.load %arg3[%c0_2, %c0_3, %4] : memref<1x4x256xf32, #tpu.memory_space<vmem>>, vector<1x4x256xf32>
    %6 = vector.shape_cast %5 : vector<1x4x256xf32> to vector<4x256xf32>
    %c0_4 = arith.constant 0 : index
    %c0_5 = arith.constant 0 : index
    %c0_6 = arith.constant 0 : index
    %7 = vector.load %arg4[%c0_4, %c0_5, %c0_6] : memref<1x4x4xf32, #tpu.memory_space<vmem>>, vector<1x4x4xf32>
    %8 = vector.shape_cast %7 : vector<1x4x4xf32> to vector<4x4xf32>
    %cst = arith.constant dense<0.000000e+00> : vector<4x256xf32>
    %9 = tpu.matmul %8, %3, %cst {dimension_numbers = #tpu.dot_dimension_numbers<[1], [0], [0], [1], [0, 0, 1, 1], [], []>} : vector<4x4xf32>, vector<4x256xf32>, vector<4x256xf32> -> vector<4x256xf32>
    %cst_7 = arith.constant dense<0.000000e+00> : vector<256x256xf32>
    %10 = tpu.matmul %6, %9, %cst_7 {dimension_numbers = #tpu.dot_dimension_numbers<[0], [0], [1], [1], [0, 1, 1, 1], [], []>} : vector<4x256xf32>, vector<4x256xf32>, vector<256x256xf32> -> vector<256x256xf32>
    %cst_8 = arith.constant dense<0xFF800000> : vector<256xf32>
    %11 = vector.multi_reduction <maximumf>, %10, %cst_8 [1] : vector<256x256xf32> to vector<256xf32>
    %12 = vector.shape_cast %11 : vector<256xf32> to vector<256x1xf32>
    %13 = vector.broadcast %12 : vector<256x1xf32> to vector<256x256xf32>
    %14 = arith.subf %10, %13 : vector<256x256xf32>
    %15 = math.exp %14 : vector<256x256xf32>
    %cst_9 = arith.constant dense<0.000000e+00> : vector<256xf32>
    %16 = vector.multi_reduction <add>, %15, %cst_9 [1] : vector<256x256xf32> to vector<256xf32>
    %17 = vector.shape_cast %16 : vector<256xf32> to vector<256x1xf32>
    %18 = tpu.reciprocal %17 {approx = true} : vector<256x1xf32> -> vector<256x1xf32>
    %19 = arith.mulf %17, %18 : vector<256x1xf32>
    %cst_10 = arith.constant 2.000000e+00 : f32
    %20 = vector.broadcast %cst_10 : f32 to vector<256x1xf32>
    %21 = arith.subf %20, %19 : vector<256x1xf32>
    %22 = arith.mulf %18, %21 : vector<256x1xf32>
    %23 = vector.broadcast %22 : vector<256x1xf32> to vector<256x256xf32>
    %24 = arith.mulf %15, %23 : vector<256x256xf32>
    %c0_11 = arith.constant 0 : index
    %c0_12 = arith.constant 0 : index
    %c0_13 = arith.constant 0 : index
    %c0_14 = arith.constant 0 : index
    %25 = vector.load %arg5[%c0_11, %c0_12, %c0_13, %c0_14] : memref<1x1x256x256xf32, #tpu.memory_space<vmem>>, vector<1x1x256x256xf32>
    %26 = vector.shape_cast %25 : vector<1x1x256x256xf32> to vector<256x256xf32>
    %27 = vector.shape_cast %24 : vector<256x256xf32> to vector<1x1x256x256xf32>
    tpu.vector_store %arg5[%c0_11, %c0_12, %c0_13, %c0_14], %27 {strides = array<i32>} : memref<1x1x256x256xf32, #tpu.memory_space<vmem>>, vector<1x1x256x256xf32>,
    return
  }
  func.func @transform_0(%arg0: i32, %arg1: i32, %arg2: i32) -> (i32, i32, i32) {
    %c0_i32 = arith.constant 0 : i32
    %c0_i32_0 = arith.constant 0 : i32
    %c0_i32_1 = arith.constant 0 : i32
    return %arg0, %c0_i32, %c0_i32_0 : i32, i32, i32
  }
  func.func @transform_1(%arg0: i32, %arg1: i32, %arg2: i32) -> (i32, i32, i32) {
    %c0_i32 = arith.constant 0 : i32
    %c0_i32_0 = arith.constant 0 : i32
    %c0_i32_1 = arith.constant 0 : i32
    return %arg1, %c0_i32, %c0_i32_0 : i32, i32, i32
  }
  func.func @transform_2(%arg0: i32, %arg1: i32, %arg2: i32) -> (i32, i32, i32, i32) {
    %c0_i32 = arith.constant 0 : i32
    %c0_i32_0 = arith.constant 0 : i32
    return %arg0, %arg1, %arg2, %c0_i32 : i32, i32, i32, i32
  }
}

</mosaic_0001>

<llo_original>
// kernel: tpu_custom_call.1
$region0: #{tpu_custom_call.1}
  #allocation0 [shape = 'u32[]', space=smem, size = 0x4, offset = 0x4, fixed_abs, tag = 'smem constant byte address 0x4 - core index']
  #allocation1 [shape = 'u32[72,128]{1,0:T(1,128)}', space=vmem, size = 0x9000, scoped, tag = 'internal scratch']
  %s0 = inlined_call_operand.hbm [shape: f32[2,4,256], index: 0, kind: input, shape index: {}]
  %s1 = inlined_call_operand.hbm [shape: f32[4,4,4], index: 1, kind: input, shape index: {}]
  %s2 = inlined_call_operand.hbm [shape: f32[2,4,256,256], index: 2, kind: output, shape index: {}]
  %s3 = sld [smem:[#allocation0]]
  $region49: #{tpu_custom_call.1} parent=0
    _
  %s5 = ssub.s32 1, %s3
  %s6 = scalar_select 0, %s5, %s3
  $region1: #{tpu_custom_call.1} parent=0
    #allocation2 [shape = 'u8[8192]{0}', space=vmem, size = 0x2000, scoped, tag = 'input window, operand 0']
    #allocation3 [shape = 's32[2]{0}', space=sflag, size = 0x8, scoped, tag = 'scoped memory for tpu_custom_call.1']
    #allocation4 [shape = 's32[2]{0}', space=sflag, size = 0x8, scoped, tag = 'scoped memory for tpu_custom_call.1']
    #allocation5 [shape = 'u8[4096]{0}', space=vmem, size = 0x1000, scoped, tag = 'input window, operand 1']
    #allocation6 [shape = 's32[2]{0}', space=sflag, size = 0x8, scoped, tag = 'scoped memory for tpu_custom_call.1']
    #allocation7 [shape = 'u8[524288]{0}', space=vmem, size = 0x80000, scoped, tag = 'output window, operand 0']
    %7 = vsyncpa [#allocation3], 0
    %s8 = scalar_lea.sflag [#allocation3], 1
    %9 = vsyncpa %s8, 0
    %10 = vsyncpa [#allocation6], 0
    %s11 = scalar_lea.sflag [#allocation6], 1
    %12 = vsyncpa %s11, 0
    %13 = vsyncpa [#allocation4], 0
    %s14 = scalar_lea.sflag [#allocation4], 1
    %15 = vsyncpa %s14, 0
    loop: start=0, step=1, limit=10
    $region2: #{tpu_custom_call.1} parent=1 // loop_pre_header
      _
    $region3: #{tpu_custom_call.1} parent=1 // loop_header
      %s17 = sphi 0, %s21
      %p18 = scmp.ge.s32.totalorder %s17, 10
      %s24 = sphi 0, %s43
      %s25 = sphi 0, %s39
      %s26 = sphi 0, %s35
      %s27 = sphi 0, %s24
      %s28 = sphi 0, %s25
      %s29 = sphi 0, %s26
      %s30 = sphi 0, %s27
      %s31 = sphi 0, %s28
      %s32 = sphi 0, %s29
      %s46 = sphi 0, %s48
      %s49 = sphi 0, %s46
      %s50 = sphi 0, %s49
      %s66 = sphi 0, %s50
      %s72 = sphi 0, %s74
      %s75 = sphi 0, %s72
      %s76 = sphi 0, %s75
      %s92 = sphi 0, %s76
      %s102 = sphi 0, %s104
      %s105 = sphi 0, %s102
      %s106 = sphi 0, %s105
      %s122 = sphi 0, %s106
    $region4: #{tpu_custom_call.1} parent=1 // loop_header_branch
      %20 = sbr.rel (%p18) target = $region8
    $region5: #{tpu_custom_call.1} parent=1 // loop_body
      %s22 = ssub.s32 %s17, 1
      %s23 = ssub.s32 %s17, 2
      %s33 = sadd.s32 1, %s26
      %p34 = scmp.ge.s32.totalorder %s33, 1
      %s35 = scalar_select %p34, 0, %s33
      %s36 = sadd.s32 1, %s25
      %s37 = scalar_select %p34, %s36, %s25
      %p38 = scmp.ge.s32.totalorder %s37, 4
      %s39 = scalar_select %p38, 0, %s37
      %s40 = sadd.s32 1, %s24
      %s41 = scalar_select %p38, %s40, %s24
      %p42 = scmp.ge.s32.totalorder %s41, 2
      %s43 = scalar_select %p42, 0, %s41
      %s44 = ssub.s32 %s24, %s43
      %p45 = scmp.eq.s32.totalorder %s44, 0
      %s47 = sadd.s32 %s46, 1
      %s48 = scalar_select %p45, %s46, %s47
      %p51 = pneg %p45
      %p52 = scmp.eq.s32.totalorder %s17, 7
      %p53 = por %p51, %p52
      %p54 = scmp.ne.s32.totalorder %s46, %s49
      %p55 = scmp.eq.s32.totalorder %s17, 0
      %p56 = por %p54, %p55
      %p57 = scmp.ne.s32.totalorder %s46, %s49
      %p58 = scmp.eq.s32.totalorder %s22, 7
      %p59 = por %p57, %p58
      %p60 = scmp.ne.s32.totalorder %s49, %s50
      %p61 = scmp.eq.s32.totalorder %s22, 0
      %p62 = por %p60, %p61
      %p63 = scmp.ne.s32.totalorder %s49, %s50
      %p64 = scmp.eq.s32.totalorder %s23, 7
      %p65 = por %p63, %p64
      %p67 = scmp.ne.s32.totalorder %s50, %s66
      %p68 = scmp.eq.s32.totalorder %s23, 0
      %p69 = por %p67, %p68
      %s70 = ssub.s32 %s25, %s39
      %p71 = scmp.eq.s32.totalorder %s70, 0
      %s73 = sadd.s32 %s72, 1
      %s74 = scalar_select %p71, %s72, %s73
      %p77 = pneg %p71
      %p78 = scmp.eq.s32.totalorder %s17, 7
      %p79 = por %p77, %p78
      %p80 = scmp.ne.s32.totalorder %s72, %s75
      %p81 = scmp.eq.s32.totalorder %s17, 0
      %p82 = por %p80, %p81
      %p83 = scmp.ne.s32.totalorder %s72, %s75
      %p84 = scmp.eq.s32.totalorder %s22, 7
      %p85 = por %p83, %p84
      %p86 = scmp.ne.s32.totalorder %s75, %s76
      %p87 = scmp.eq.s32.totalorder %s22, 0
      %p88 = por %p86, %p87
      %p89 = scmp.ne.s32.totalorder %s75, %s76
      %p90 = scmp.eq.s32.totalorder %s23, 7
      %p91 = por %p89, %p90
      %p93 = scmp.ne.s32.totalorder %s76, %s92
      %p94 = scmp.eq.s32.totalorder %s23, 0
      %p95 = por %p93, %p94
      %s96 = ssub.s32 %s24, %s43
      %s97 = ssub.s32 %s25, %s39
      %s98 = sor.u32 %s96, %s97
      %s99 = ssub.s32 %s26, %s35
      %s100 = sor.u32 %s98, %s99
      %p101 = scmp.eq.s32.totalorder %s100, 0
      %s103 = sadd.s32 %s102, 1
      %s104 = scalar_select %p101, %s102, %s103
      %p107 = pneg %p101
      %p108 = scmp.eq.s32.totalorder %s17, 7
      %p109 = por %p107, %p108
      %p110 = scmp.ne.s32.totalorder %s102, %s105
      %p111 = scmp.eq.s32.totalorder %s17, 0
      %p112 = por %p110, %p111
      %p113 = scmp.ne.s32.totalorder %s102, %s105
      %p114 = scmp.eq.s32.totalorder %s22, 7
      %p115 = por %p113, %p114
      %p116 = scmp.ne.s32.totalorder %s105, %s106
      %p117 = scmp.eq.s32.totalorder %s22, 0
      %p118 = por %p116, %p117
      %p119 = scmp.ne.s32.totalorder %s105, %s106
      %p120 = scmp.eq.s32.totalorder %s23, 7
      %p121 = por %p119, %p120
      %p123 = scmp.ne.s32.totalorder %s106, %s122
      %p124 = scmp.eq.s32.totalorder %s23, 0
      %p125 = por %p123, %p124
      %p126 = scmp.le.s32.totalorder 1, %s17
      %p127 = scmp.lt.s32.totalorder %s17, 9
      %p128 = pnand %p126, %p127
      %p129 = pneg %p128
      // Predicated region
      $region9: #{tpu_custom_call.1} parent=5 // pred_check
        _
      $region10: #{tpu_custom_call.1} parent=5 // pred_check_branch
        %131 = sbr.rel (%p128) target = $region12
      $region11: #{tpu_custom_call.1} parent=5 // pred_region
        %s132 = ssub.s32 %s17, 1
      $region12: #{tpu_custom_call.1} parent=5 // pred_fallthru
        _
      %p133 = scmp.lt.s32.totalorder %s17, 8
      // Predicated region
      $region13: #{tpu_custom_call.1} parent=5 // pred_check
        %p134 = pneg %p133
      $region14: #{tpu_custom_call.1} parent=5 // pred_check_branch
        %136 = sbr.rel (%p134) target = $region16
      $region15: #{tpu_custom_call.1} parent=5 // pred_region
        // Predicated region
        $region17: #{tpu_custom_call.1} parent=15 // pred_check
          %p137 = pneg %p56
        $region18: #{tpu_custom_call.1} parent=15 // pred_check_branch
          %139 = sbr.rel (%p137) target = $region20
        $region19: #{tpu_custom_call.1} parent=15 // pred_region
          %s140 = sand.u32 %s46, 1
          %s141 = scalar_lea.sflag [#allocation3], %s140
          %s142 = sand.u32 %s46, 1
          %s143 = smul.addr %s142, 8
          %s144 = scalar_lea.vmem [#allocation2], %s143
          %146 = vsyncadd %s141, 0
          %s147 = smul.addr %s24, 2
          %s148 = smul.addr %s147, 4
          %s149 = scalar_lea.hbm %s0, %s148
          %s151 = sshll.u32 %s149, 4
          %s152 = int_to_ptr.hbm [resolvable:$true] %s151
          %s153 = sshll.u32 %s144, 4
          %s154 = int_to_ptr.vmem [resolvable:$true] %s153
          %156 = dma.hbm_to_vmem [thread:$0]  %s152, 128, %s154, %s141
        $region20: #{tpu_custom_call.1} parent=15 // pred_fallthru
          _
        // Predicated region
        $region21: #{tpu_custom_call.1} parent=15 // pred_check
          %p157 = pneg %p82
        $region22: #{tpu_custom_call.1} parent=15 // pred_check_branch
          %159 = sbr.rel (%p157) target = $region24
        $region23: #{tpu_custom_call.1} parent=15 // pred_region
          %s160 = sand.u32 %s72, 1
          %s161 = scalar_lea.sflag [#allocation6], %s160
          %s162 = sand.u32 %s72, 1
          %s163 = smul.addr %s162, 4
          %s164 = scalar_lea.vmem [#allocation5], %s163
          %166 = vsyncadd %s161, 0
          %s167 = smul.addr %s25, 4
          %s168 = scalar_lea.hbm %s1, %s167
          %s170 = sshll.u32 %s168, 4
          %s171 = int_to_ptr.hbm [resolvable:$true] %s170
          %s172 = sshll.u32 %s164, 4
          %s173 = int_to_ptr.vmem [resolvable:$true] %s172
          %175 = dma.hbm_to_vmem [thread:$0]  %s171, 64, %s173, %s161
        $region24: #{tpu_custom_call.1} parent=15 // pred_fallthru
          _
      $region16: #{tpu_custom_call.1} parent=5 // pred_fallthru
        _
      %p176 = scmp.le.s32.totalorder 1, %s17
      %p177 = scmp.lt.s32.totalorder %s17, 9
      %p178 = pnand %p176, %p177
      %p179 = pneg %p178
      // Predicated region
      $region25: #{tpu_custom_call.1} parent=5 // pred_check
        _
      $region26: #{tpu_custom_call.1} parent=5 // pred_check_branch
        %181 = sbr.rel (%p178) target = $region28
      $region27: #{tpu_custom_call.1} parent=5 // pred_region
        %s182 = ssub.s32 %s17, 1
        %s183 = sand.u32 %s49, 1
        %s184 = scalar_lea.sflag [#allocation3], %s183
        %s185 = sand.u32 %s49, 1
        %s186 = smul.addr %s185, 8
        %s187 = scalar_lea.vmem [#allocation2], %s186
        // Predicated region
        $region29: #{tpu_custom_call.1} parent=27 // pred_check
          %p188 = pneg %p62
        $region30: #{tpu_custom_call.1} parent=27 // pred_check_branch
          %190 = sbr.rel (%p188) target = $region32
        $region31: #{tpu_custom_call.1} parent=27 // pred_region
          %192 = dma.done %s184, 128
        $region32: #{tpu_custom_call.1} parent=27 // pred_fallthru
          _
        %s193 = sand.u32 %s75, 1
        %s194 = scalar_lea.sflag [#allocation6], %s193
        %s195 = sand.u32 %s75, 1
        %s196 = smul.addr %s195, 4
        %s197 = scalar_lea.vmem [#allocation5], %s196
        // Predicated region
        $region33: #{tpu_custom_call.1} parent=27 // pred_check
          %p198 = pneg %p88
        $region34: #{tpu_custom_call.1} parent=27 // pred_check_branch
          %200 = sbr.rel (%p198) target = $region36
        $region35: #{tpu_custom_call.1} parent=27 // pred_region
          %202 = dma.done %s194, 64
        $region36: #{tpu_custom_call.1} parent=27 // pred_fallthru
          _
        %s203 = sand.u32 %s49, 1
        %s204 = scalar_lea.sflag [#allocation3], %s203
        %s205 = sand.u32 %s49, 1
        %s206 = smul.addr %s205, 8
        %s207 = scalar_lea.vmem [#allocation2], %s206
        %p208 = pneg %p62
        %p209 = pneg %p59
        %s210 = sand.u32 %s75, 1
        %s211 = scalar_lea.sflag [#allocation6], %s210
        %s212 = sand.u32 %s75, 1
        %s213 = smul.addr %s212, 4
        %s214 = scalar_lea.vmem [#allocation5], %s213
        %p215 = pneg %p88
        %p216 = pneg %p85
        %p217 = pneg %p118
        %p218 = pneg %p115
        %s219 = sand.u32 %s105, 1
        %s220 = scalar_lea.sflag [#allocation4], %s219
        %s221 = sand.u32 %s105, 1
        %s222 = smul.addr %s221, 512
        %s223 = scalar_lea.vmem [#allocation7], %s222
        %s224 = smul.u32 32, %s29
        %s225 = smul.u32 %s29, 256
        %v226 = vld [vmem:[%s187] sm:$0xff]
        %s227 = sshra.s32 %s225, 7
        %s228 = sand.u32 %s225, 127
        %s229 = smul.addr %s227, 4
        %s230 = scalar_lea.vmem %s187, %s229 [#allocation2]
        %v231 = vld [vmem:[%s230] sm:$0xff]
        %v232 = vld [vmem:[%s197] sm:$0xf]
        %234 = vst [vmem:[#allocation1] ss:$2 sm:$0xff] %v226
        %v235 = vld.sshfl [vmem:[#allocation1] sm:$0xff pattern:$0x75316420]
        %v236 = vld.sshfl [vmem:[#allocation1 + $0x8] sm:$0xff pattern:$0x75316420]
        %vm237 = vcmask 31744
        %v239 = vsel %vm237, %v232, 0
        %vm241 = vcmask 1043456
        %v242 = vsel %vm241, %v235, 0
        %v244 = vsel %vm241, %v236, 0
        %246 = vmatpush.msra.mxu0 0.0
        %247 = vmatpush.msra.mxu0 0.0
        %248 = vmatpush.msra.mxu0 0.0
        %249 = vmatpush.msra.mxu0 0.0
        %250 = vmatpush.msra.mxu0 0.0
        %251 = vmatpush.msra.mxu0 0.0
        %252 = vmatpush.msra.mxu0 0.0
        %253 = vmatpush.msra.mxu0 0.0
        %254 = vmatpush.msra.mxu0 0.0
        %255 = vmatpush.msra.mxu0 0.0
        %256 = vmatpush.msra.mxu0 0.0
        %257 = vmatpush.msra.mxu0 0.0
        %258 = vmatpush.msra.mxu0 0.0
        %259 = vmatpush.msra.mxu0 0.0
        %260 = vmatpush.msra.mxu0 0.0
        %261 = vmatpush.msra.mxu0 %v242
        %262 = vmatmul.f32.gmra.mxu0 %v239
        %v263 = vpop.f32.mrf.mxu0
        %v264 = vadd.f32 0.0, %v263
        %265 = vdwg.mxu0
        %266 = vmatpush.msra.mxu0 0.0
        %267 = vmatpush.msra.mxu0 0.0
        %268 = vmatpush.msra.mxu0 0.0
        %269 = vmatpush.msra.mxu0 0.0
        %270 = vmatpush.msra.mxu0 0.0
        %271 = vmatpush.msra.mxu0 0.0
        %272 = vmatpush.msra.mxu0 0.0
        %273 = vmatpush.msra.mxu0 0.0
        %274 = vmatpush.msra.mxu0 0.0
        %275 = vmatpush.msra.mxu0 0.0
        %276 = vmatpush.msra.mxu0 0.0
        %277 = vmatpush.msra.mxu0 0.0
        %278 = vmatpush.msra.mxu0 0.0
        %279 = vmatpush.msra.mxu0 0.0
        %280 = vmatpush.msra.mxu0 0.0
        %281 = vmatpush.msra.mxu0 %v244
        %282 = vmatmul.f32.gmra.mxu0 %v239
        %v283 = vpop.f32.mrf.mxu0
        %v284 = vadd.f32 0.0, %v283
        %285 = vdwg.mxu0
        %287 = vst [vmem:[#allocation1] ss:$2 sm:$0xff] %v231
        %v288 = vld.sshfl [vmem:[#allocation1] sm:$0xff pattern:$0x75316420]
        %v289 = vld.sshfl [vmem:[#allocation1 + $0x8] sm:$0xff pattern:$0x75316420]
        %292 = vxpose.xlu0.b32.start [1/16] %v288, 128
        %293 = vxpose.xlu0.b32.cont [2/16] 0.0, 128
        %294 = vxpose.xlu0.b32.cont [3/16] 0.0, 128
        %295 = vxpose.xlu0.b32.cont [4/16] 0.0, 128
        %296 = vxpose.xlu0.b32.cont [5/16] 0.0, 128
        %297 = vxpose.xlu0.b32.cont [6/16] 0.0, 128
        %298 = vxpose.xlu0.b32.cont [7/16] 0.0, 128
        %299 = vxpose.xlu0.b32.cont [8/16] 0.0, 128
        %300 = vxpose.xlu0.b32.cont [9/16] 0.0, 128
        %301 = vxpose.xlu0.b32.cont [10/16] 0.0, 128
        %302 = vxpose.xlu0.b32.cont [11/16] 0.0, 128
        %303 = vxpose.xlu0.b32.cont [12/16] 0.0, 128
        %304 = vxpose.xlu0.b32.cont [13/16] 0.0, 128
        %305 = vxpose.xlu0.b32.cont [14/16] 0.0, 128
        %306 = vxpose.xlu0.b32.cont [15/16] 0.0, 128
        %307 = vxpose.xlu0.b32.end [16/16] 0.0, 128
        %v308 = vpop.trf.xlu0
        %v309 = vpop.trf.xlu0
        %v310 = vpop.trf.xlu0
        %v311 = vpop.trf.xlu0
        %v312 = vpop.trf.xlu0
        %v313 = vpop.trf.xlu0
        %v314 = vpop.trf.xlu0
        %v315 = vpop.trf.xlu0
        %v316 = vpop.trf.xlu0
        %v317 = vpop.trf.xlu0
        %v318 = vpop.trf.xlu0
        %v319 = vpop.trf.xlu0
        %v320 = vpop.trf.xlu0
        %v321 = vpop.trf.xlu0
        %v322 = vpop.trf.xlu0
        %v323 = vpop.trf.xlu0
        %324 = vxpose.xlu0.b32.start [1/16] %v289, 128
        %325 = vxpose.xlu0.b32.cont [2/16] 0.0, 128
        %326 = vxpose.xlu0.b32.cont [3/16] 0.0, 128
        %327 = vxpose.xlu0.b32.cont [4/16] 0.0, 128
        %328 = vxpose.xlu0.b32.cont [5/16] 0.0, 128
        %329 = vxpose.xlu0.b32.cont [6/16] 0.0, 128
        %330 = vxpose.xlu0.b32.cont [7/16] 0.0, 128
        %331 = vxpose.xlu0.b32.cont [8/16] 0.0, 128
        %332 = vxpose.xlu0.b32.cont [9/16] 0.0, 128
        %333 = vxpose.xlu0.b32.cont [10/16] 0.0, 128
        %334 = vxpose.xlu0.b32.cont [11/16] 0.0, 128
        %335 = vxpose.xlu0.b32.cont [12/16] 0.0, 128
        %336 = vxpose.xlu0.b32.cont [13/16] 0.0, 128
        %337 = vxpose.xlu0.b32.cont [14/16] 0.0, 128
        %338 = vxpose.xlu0.b32.cont [15/16] 0.0, 128
        %339 = vxpose.xlu0.b32.end [16/16] 0.0, 128
        %v340 = vpop.trf.xlu0
        %v341 = vpop.trf.xlu0
        %v342 = vpop.trf.xlu0
        %v343 = vpop.trf.xlu0
        %v344 = vpop.trf.xlu0
        %v345 = vpop.trf.xlu0
        %v346 = vpop.trf.xlu0
        %v347 = vpop.trf.xlu0
        %v348 = vpop.trf.xlu0
        %v349 = vpop.trf.xlu0
        %v350 = vpop.trf.xlu0
        %v351 = vpop.trf.xlu0
        %v352 = vpop.trf.xlu0
        %v353 = vpop.trf.xlu0
        %v354 = vpop.trf.xlu0
        %v355 = vpop.trf.xlu0
        %v357 = vsel %vm237, %v308, 0
        %v360 = vsel %vm237, %v309, 0
        %v363 = vsel %vm237, %v310, 0
        %v366 = vsel %vm237, %v311, 0
        %v369 = vsel %vm237, %v312, 0
        %v372 = vsel %vm237, %v313, 0
        %v375 = vsel %vm237, %v314, 0
        %v378 = vsel %vm237, %v315, 0
        %v381 = vsel %vm237, %v316, 0
        %v384 = vsel %vm237, %v317, 0
        %v387 = vsel %vm237, %v318, 0
        %v390 = vsel %vm237, %v319, 0
        %v393 = vsel %vm237, %v320, 0
        %v396 = vsel %vm237, %v321, 0
        %v399 = vsel %vm237, %v322, 0
        %v402 = vsel %vm237, %v323, 0
        %v405 = vsel %vm237, %v340, 0
        %v408 = vsel %vm237, %v341, 0
        %v411 = vsel %vm237, %v342, 0
        %v414 = vsel %vm237, %v343, 0
        %v417 = vsel %vm237, %v344, 0
        %v420 = vsel %vm237, %v345, 0
        %v423 = vsel %vm237, %v346, 0
        %v426 = vsel %vm237, %v347, 0
        %v429 = vsel %vm237, %v348, 0
        %v432 = vsel %vm237, %v349, 0
        %v435 = vsel %vm237, %v350, 0
        %v438 = vsel %vm237, %v351, 0
        %v441 = vsel %vm237, %v352, 0
        %v444 = vsel %vm237, %v353, 0
        %v447 = vsel %vm237, %v354, 0
        %v450 = vsel %vm237, %v355, 0
        %v453 = vsel %vm241, %v264, 0
        %v456 = vsel %vm241, %v284, 0
        %458 = vmatpush.msra.mxu0 0.0
        %459 = vmatpush.msra.mxu0 0.0
        %460 = vmatpush.msra.mxu0 0.0
        %461 = vmatpush.msra.mxu0 0.0
        %462 = vmatpush.msra.mxu0 0.0
        %463 = vmatpush.msra.mxu0 0.0
        %464 = vmatpush.msra.mxu0 0.0
        %465 = vmatpush.msra.mxu0 0.0
        %466 = vmatpush.msra.mxu0 0.0
        %467 = vmatpush.msra.mxu0 0.0
        %468 = vmatpush.msra.mxu0 0.0
        %469 = vmatpush.msra.mxu0 0.0
        %470 = vmatpush.msra.mxu0 0.0
        %471 = vmatpush.msra.mxu0 0.0
        %472 = vmatpush.msra.mxu0 0.0
        %473 = vmatpush.msra.mxu0 %v453
        %474 = vmatmul.f32.gmra.mxu0 %v357
        %v475 = vpop.f32.mrf.mxu0
        %v476 = vadd.f32 0.0, %v475
        %477 = vmatmul.f32.gmra.mxu0 %v360
        %v478 = vpop.f32.mrf.mxu0
        %v479 = vadd.f32 0.0, %v478
        %480 = vmatmul.f32.gmra.mxu0 %v363
        %v481 = vpop.f32.mrf.mxu0
        %v482 = vadd.f32 0.0, %v481
        %483 = vmatmul.f32.gmra.mxu0 %v366
        %v484 = vpop.f32.mrf.mxu0
        %v485 = vadd.f32 0.0, %v484
        %486 = vmatmul.f32.gmra.mxu0 %v369
        %v487 = vpop.f32.mrf.mxu0
        %v488 = vadd.f32 0.0, %v487
        %489 = vmatmul.f32.gmra.mxu0 %v372
        %v490 = vpop.f32.mrf.mxu0
        %v491 = vadd.f32 0.0, %v490
        %492 = vmatmul.f32.gmra.mxu0 %v375
        %v493 = vpop.f32.mrf.mxu0
        %v494 = vadd.f32 0.0, %v493
        %495 = vmatmul.f32.gmra.mxu0 %v378
        %v496 = vpop.f32.mrf.mxu0
        %v497 = vadd.f32 0.0, %v496
        %498 = vmatmul.f32.gmra.mxu0 %v381
        %v499 = vpop.f32.mrf.mxu0
        %v500 = vadd.f32 0.0, %v499
        %501 = vmatmul.f32.gmra.mxu0 %v384
        %v502 = vpop.f32.mrf.mxu0
        %v503 = vadd.f32 0.0, %v502
        %504 = vmatmul.f32.gmra.mxu0 %v387
        %v505 = vpop.f32.mrf.mxu0
        %v506 = vadd.f32 0.0, %v505
        %507 = vmatmul.f32.gmra.mxu0 %v390
        %v508 = vpop.f32.mrf.mxu0
        %v509 = vadd.f32 0.0, %v508
        %510 = vmatmul.f32.gmra.mxu0 %v393
        %v511 = vpop.f32.mrf.mxu0
        %v512 = vadd.f32 0.0, %v511
        %513 = vmatmul.f32.gmra.mxu0 %v396
        %v514 = vpop.f32.mrf.mxu0
        %v515 = vadd.f32 0.0, %v514
        %516 = vmatmul.f32.gmra.mxu0 %v399
        %v517 = vpop.f32.mrf.mxu0
        %v518 = vadd.f32 0.0, %v517
        %519 = vmatmul.f32.gmra.mxu0 %v402
        %v520 = vpop.f32.mrf.mxu0
        %v521 = vadd.f32 0.0, %v520
        %522 = vmatmul.f32.gmra.mxu0 %v405
        %v523 = vpop.f32.mrf.mxu0
        %v524 = vadd.f32 0.0, %v523
        %525 = vmatmul.f32.gmra.mxu0 %v408
        %v526 = vpop.f32.mrf.mxu0
        %v527 = vadd.f32 0.0, %v526
        %528 = vmatmul.f32.gmra.mxu0 %v411
        %v529 = vpop.f32.mrf.mxu0
        %v530 = vadd.f32 0.0, %v529
        %531 = vmatmul.f32.gmra.mxu0 %v414
        %v532 = vpop.f32.mrf.mxu0
        %v533 = vadd.f32 0.0, %v532
        %534 = vmatmul.f32.gmra.mxu0 %v417
        %v535 = vpop.f32.mrf.mxu0
        %v536 = vadd.f32 0.0, %v535
        %537 = vmatmul.f32.gmra.mxu0 %v420
        %v538 = vpop.f32.mrf.mxu0
        %v539 = vadd.f32 0.0, %v538
        %540 = vmatmul.f32.gmra.mxu0 %v423
        %v541 = vpop.f32.mrf.mxu0
        %v542 = vadd.f32 0.0, %v541
        %543 = vmatmul.f32.gmra.mxu0 %v426
        %v544 = vpop.f32.mrf.mxu0
        %v545 = vadd.f32 0.0, %v544
        %546 = vmatmul.f32.gmra.mxu0 %v429
        %v547 = vpop.f32.mrf.mxu0
        %v548 = vadd.f32 0.0, %v547
        %549 = vmatmul.f32.gmra.mxu0 %v432
        %v550 = vpop.f32.mrf.mxu0
        %v551 = vadd.f32 0.0, %v550
        %552 = vmatmul.f32.gmra.mxu0 %v435
        %v553 = vpop.f32.mrf.mxu0
        %v554 = vadd.f32 0.0, %v553
        %555 = vmatmul.f32.gmra.mxu0 %v438
        %v556 = vpop.f32.mrf.mxu0
        %v557 = vadd.f32 0.0, %v556
        %558 = vmatmul.f32.gmra.mxu0 %v441
        %v559 = vpop.f32.mrf.mxu0
        %v560 = vadd.f32 0.0, %v559
        %561 = vmatmul.f32.gmra.mxu0 %v444
        %v562 = vpop.f32.mrf.mxu0
        %v563 = vadd.f32 0.0, %v562
        %564 = vmatmul.f32.gmra.mxu0 %v447
        %v565 = vpop.f32.mrf.mxu0
        %v566 = vadd.f32 0.0, %v565
        %567 = vmatmul.f32.gmra.mxu0 %v450
        %v568 = vpop.f32.mrf.mxu0
        %v569 = vadd.f32 0.0, %v568
        %570 = vdwg.mxu0
        %571 = vmatpush.msra.mxu0 0.0
        %572 = vmatpush.msra.mxu0 0.0
        %573 = vmatpush.msra.mxu0 0.0
        %574 = vmatpush.msra.mxu0 0.0
        %575 = vmatpush.msra.mxu0 0.0
        %576 = vmatpush.msra.mxu0 0.0
        %577 = vmatpush.msra.mxu0 0.0
        %578 = vmatpush.msra.mxu0 0.0
        %579 = vmatpush.msra.mxu0 0.0
        %580 = vmatpush.msra.mxu0 0.0
        %581 = vmatpush.msra.mxu0 0.0
        %582 = vmatpush.msra.mxu0 0.0
        %583 = vmatpush.msra.mxu0 0.0
        %584 = vmatpush.msra.mxu0 0.0
        %585 = vmatpush.msra.mxu0 0.0
        %586 = vmatpush.msra.mxu0 %v456
        %587 = vmatmul.f32.gmra.mxu0 %v357
        %v588 = vpop.f32.mrf.mxu0
        %v589 = vadd.f32 0.0, %v588
        %590 = vmatmul.f32.gmra.mxu0 %v360
        %v591 = vpop.f32.mrf.mxu0
        %v592 = vadd.f32 0.0, %v591
        %593 = vmatmul.f32.gmra.mxu0 %v363
        %v594 = vpop.f32.mrf.mxu0
        %v595 = vadd.f32 0.0, %v594
        %596 = vmatmul.f32.gmra.mxu0 %v366
        %v597 = vpop.f32.mrf.mxu0
        %v598 = vadd.f32 0.0, %v597
        %599 = vmatmul.f32.gmra.mxu0 %v369
        %v600 = vpop.f32.mrf.mxu0
        %v601 = vadd.f32 0.0, %v600
        %602 = vmatmul.f32.gmra.mxu0 %v372
        %v603 = vpop.f32.mrf.mxu0
        %v604 = vadd.f32 0.0, %v603
        %605 = vmatmul.f32.gmra.mxu0 %v375
        %v606 = vpop.f32.mrf.mxu0
        %v607 = vadd.f32 0.0, %v606
        %608 = vmatmul.f32.gmra.mxu0 %v378
        %v609 = vpop.f32.mrf.mxu0
        %v610 = vadd.f32 0.0, %v609
        %611 = vmatmul.f32.gmra.mxu0 %v381
        %v612 = vpop.f32.mrf.mxu0
        %v613 = vadd.f32 0.0, %v612
        %614 = vmatmul.f32.gmra.mxu0 %v384
        %v615 = vpop.f32.mrf.mxu0
        %v616 = vadd.f32 0.0, %v615
        %617 = vmatmul.f32.gmra.mxu0 %v387
        %v618 = vpop.f32.mrf.mxu0
        %v619 = vadd.f32 0.0, %v618
        %620 = vmatmul.f32.gmra.mxu0 %v390
        %v621 = vpop.f32.mrf.mxu0
        %v622 = vadd.f32 0.0, %v621
        %623 = vmatmul.f32.gmra.mxu0 %v393
        %v624 = vpop.f32.mrf.mxu0
        %v625 = vadd.f32 0.0, %v624
        %626 = vmatmul.f32.gmra.mxu0 %v396
        %v627 = vpop.f32.mrf.mxu0
        %v628 = vadd.f32 0.0, %v627
        %629 = vmatmul.f32.gmra.mxu0 %v399
        %v630 = vpop.f32.mrf.mxu0
        %v631 = vadd.f32 0.0, %v630
        %632 = vmatmul.f32.gmra.mxu0 %v402
        %v633 = vpop.f32.mrf.mxu0
        %v634 = vadd.f32 0.0, %v633
        %635 = vmatmul.f32.gmra.mxu0 %v405
        %v636 = vpop.f32.mrf.mxu0
        %v637 = vadd.f32 0.0, %v636
        %638 = vmatmul.f32.gmra.mxu0 %v408
        %v639 = vpop.f32.mrf.mxu0
        %v640 = vadd.f32 0.0, %v639
        %641 = vmatmul.f32.gmra.mxu0 %v411
        %v642 = vpop.f32.mrf.mxu0
        %v643 = vadd.f32 0.0, %v642
        %644 = vmatmul.f32.gmra.mxu0 %v414
        %v645 = vpop.f32.mrf.mxu0
        %v646 = vadd.f32 0.0, %v645
        %647 = vmatmul.f32.gmra.mxu0 %v417
        %v648 = vpop.f32.mrf.mxu0
        %v649 = vadd.f32 0.0, %v648
        %650 = vmatmul.f32.gmra.mxu0 %v420
        %v651 = vpop.f32.mrf.mxu0
        %v652 = vadd.f32 0.0, %v651
        %653 = vmatmul.f32.gmra.mxu0 %v423
        %v654 = vpop.f32.mrf.mxu0
        %v655 = vadd.f32 0.0, %v654
        %656 = vmatmul.f32.gmra.mxu0 %v426
        %v657 = vpop.f32.mrf.mxu0
        %v658 = vadd.f32 0.0, %v657
        %659 = vmatmul.f32.gmra.mxu0 %v429
        %v660 = vpop.f32.mrf.mxu0
        %v661 = vadd.f32 0.0, %v660
        %662 = vmatmul.f32.gmra.mxu0 %v432
        %v663 = vpop.f32.mrf.mxu0
        %v664 = vadd.f32 0.0, %v663
        %665 = vmatmul.f32.gmra.mxu0 %v435
        %v666 = vpop.f32.mrf.mxu0
        %v667 = vadd.f32 0.0, %v666
        %668 = vmatmul.f32.gmra.mxu0 %v438
        %v669 = vpop.f32.mrf.mxu0
        %v670 = vadd.f32 0.0, %v669
        %671 = vmatmul.f32.gmra.mxu0 %v441
        %v672 = vpop.f32.mrf.mxu0
        %v673 = vadd.f32 0.0, %v672
        %674 = vmatmul.f32.gmra.mxu0 %v444
        %v675 = vpop.f32.mrf.mxu0
        %v676 = vadd.f32 0.0, %v675
        %677 = vmatmul.f32.gmra.mxu0 %v447
        %v678 = vpop.f32.mrf.mxu0
        %v679 = vadd.f32 0.0, %v678
        %680 = vmatmul.f32.gmra.mxu0 %v450
        %v681 = vpop.f32.mrf.mxu0
        %v682 = vadd.f32 0.0, %v681
        %683 = vdwg.mxu0
        %v684 = vmax.f32 %v476, %v589
        %685 = vmax.xlane.f32.xlu0 %v684
        %v686 = vpop.xlane.xlu0 %685
        %v687 = vmax.f32 %v479, %v592
        %688 = vmax.xlane.f32.xlu0 %v687
        %v689 = vpop.xlane.xlu0 %688
        %v690 = vmax.f32 %v482, %v595
        %691 = vmax.xlane.f32.xlu0 %v690
        %v692 = vpop.xlane.xlu0 %691
        %v693 = vmax.f32 %v485, %v598
        %694 = vmax.xlane.f32.xlu0 %v693
        %v695 = vpop.xlane.xlu0 %694
        %v696 = vmax.f32 %v488, %v601
        %697 = vmax.xlane.f32.xlu0 %v696
        %v698 = vpop.xlane.xlu0 %697
        %v699 = vmax.f32 %v491, %v604
        %700 = vmax.xlane.f32.xlu0 %v699
        %v701 = vpop.xlane.xlu0 %700
        %v702 = vmax.f32 %v494, %v607
        %703 = vmax.xlane.f32.xlu0 %v702
        %v704 = vpop.xlane.xlu0 %703
        %v705 = vmax.f32 %v497, %v610
        %706 = vmax.xlane.f32.xlu0 %v705
        %v707 = vpop.xlane.xlu0 %706
        %v708 = vmax.f32 %v500, %v613
        %709 = vmax.xlane.f32.xlu0 %v708
        %v710 = vpop.xlane.xlu0 %709
        %v711 = vmax.f32 %v503, %v616
        %712 = vmax.xlane.f32.xlu0 %v711
        %v713 = vpop.xlane.xlu0 %712
        %v714 = vmax.f32 %v506, %v619
        %715 = vmax.xlane.f32.xlu0 %v714
        %v716 = vpop.xlane.xlu0 %715
        %v717 = vmax.f32 %v509, %v622
        %718 = vmax.xlane.f32.xlu0 %v717
        %v719 = vpop.xlane.xlu0 %718
        %v720 = vmax.f32 %v512, %v625
        %721 = vmax.xlane.f32.xlu0 %v720
        %v722 = vpop.xlane.xlu0 %721
        %v723 = vmax.f32 %v515, %v628
        %724 = vmax.xlane.f32.xlu0 %v723
        %v725 = vpop.xlane.xlu0 %724
        %v726 = vmax.f32 %v518, %v631
        %727 = vmax.xlane.f32.xlu0 %v726
        %v728 = vpop.xlane.xlu0 %727
        %v729 = vmax.f32 %v521, %v634
        %730 = vmax.xlane.f32.xlu0 %v729
        %v731 = vpop.xlane.xlu0 %730
        %v732 = vmax.f32 %v524, %v637
        %733 = vmax.xlane.f32.xlu0 %v732
        %v734 = vpop.xlane.xlu0 %733
        %v735 = vmax.f32 %v527, %v640
        %736 = vmax.xlane.f32.xlu0 %v735
        %v737 = vpop.xlane.xlu0 %736
        %v738 = vmax.f32 %v530, %v643
        %739 = vmax.xlane.f32.xlu0 %v738
        %v740 = vpop.xlane.xlu0 %739
        %v741 = vmax.f32 %v533, %v646
        %742 = vmax.xlane.f32.xlu0 %v741
        %v743 = vpop.xlane.xlu0 %742
        %v744 = vmax.f32 %v536, %v649
        %745 = vmax.xlane.f32.xlu0 %v744
        %v746 = vpop.xlane.xlu0 %745
        %v747 = vmax.f32 %v539, %v652
        %748 = vmax.xlane.f32.xlu0 %v747
        %v749 = vpop.xlane.xlu0 %748
        %v750 = vmax.f32 %v542, %v655
        %751 = vmax.xlane.f32.xlu0 %v750
        %v752 = vpop.xlane.xlu0 %751
        %v753 = vmax.f32 %v545, %v658
        %754 = vmax.xlane.f32.xlu0 %v753
        %v755 = vpop.xlane.xlu0 %754
        %v756 = vmax.f32 %v548, %v661
        %757 = vmax.xlane.f32.xlu0 %v756
        %v758 = vpop.xlane.xlu0 %757
        %v759 = vmax.f32 %v551, %v664
        %760 = vmax.xlane.f32.xlu0 %v759
        %v761 = vpop.xlane.xlu0 %760
        %v762 = vmax.f32 %v554, %v667
        %763 = vmax.xlane.f32.xlu0 %v762
        %v764 = vpop.xlane.xlu0 %763
        %v765 = vmax.f32 %v557, %v670
        %766 = vmax.xlane.f32.xlu0 %v765
        %v767 = vpop.xlane.xlu0 %766
        %v768 = vmax.f32 %v560, %v673
        %769 = vmax.xlane.f32.xlu0 %v768
        %v770 = vpop.xlane.xlu0 %769
        %v771 = vmax.f32 %v563, %v676
        %772 = vmax.xlane.f32.xlu0 %v771
        %v773 = vpop.xlane.xlu0 %772
        %v774 = vmax.f32 %v566, %v679
        %775 = vmax.xlane.f32.xlu0 %v774
        %v776 = vpop.xlane.xlu0 %775
        %v777 = vmax.f32 %v569, %v682
        %778 = vmax.xlane.f32.xlu0 %v777
        %v779 = vpop.xlane.xlu0 %778
        %v780 = vsub.f32 %v476, %v686
        %v781 = vsub.f32 %v589, %v686
        %v782 = vsub.f32 %v479, %v689
        %v783 = vsub.f32 %v592, %v689
        %v784 = vsub.f32 %v482, %v692
        %v785 = vsub.f32 %v595, %v692
        %v786 = vsub.f32 %v485, %v695
        %v787 = vsub.f32 %v598, %v695
        %v788 = vsub.f32 %v488, %v698
        %v789 = vsub.f32 %v601, %v698
        %v790 = vsub.f32 %v491, %v701
        %v791 = vsub.f32 %v604, %v701
        %v792 = vsub.f32 %v494, %v704
        %v793 = vsub.f32 %v607, %v704
        %v794 = vsub.f32 %v497, %v707
        %v795 = vsub.f32 %v610, %v707
        %v796 = vsub.f32 %v500, %v710
        %v797 = vsub.f32 %v613, %v710
        %v798 = vsub.f32 %v503, %v713
        %v799 = vsub.f32 %v616, %v713
        %v800 = vsub.f32 %v506, %v716
        %v801 = vsub.f32 %v619, %v716
        %v802 = vsub.f32 %v509, %v719
        %v803 = vsub.f32 %v622, %v719
        %v804 = vsub.f32 %v512, %v722
        %v805 = vsub.f32 %v625, %v722
        %v806 = vsub.f32 %v515, %v725
        %v807 = vsub.f32 %v628, %v725
        %v808 = vsub.f32 %v518, %v728
        %v809 = vsub.f32 %v631, %v728
        %v810 = vsub.f32 %v521, %v731
        %v811 = vsub.f32 %v634, %v731
        %v812 = vsub.f32 %v524, %v734
        %v813 = vsub.f32 %v637, %v734
        %v814 = vsub.f32 %v527, %v737
        %v815 = vsub.f32 %v640, %v737
        %v816 = vsub.f32 %v530, %v740
        %v817 = vsub.f32 %v643, %v740
        %v818 = vsub.f32 %v533, %v743
        %v819 = vsub.f32 %v646, %v743
        %v820 = vsub.f32 %v536, %v746
        %v821 = vsub.f32 %v649, %v746
        %v822 = vsub.f32 %v539, %v749
        %v823 = vsub.f32 %v652, %v749
        %v824 = vsub.f32 %v542, %v752
        %v825 = vsub.f32 %v655, %v752
        %v826 = vsub.f32 %v545, %v755
        %v827 = vsub.f32 %v658, %v755
        %v828 = vsub.f32 %v548, %v758
        %v829 = vsub.f32 %v661, %v758
        %v830 = vsub.f32 %v551, %v761
        %v831 = vsub.f32 %v664, %v761
        %v832 = vsub.f32 %v554, %v764
        %v833 = vsub.f32 %v667, %v764
        %v834 = vsub.f32 %v557, %v767
        %v835 = vsub.f32 %v670, %v767
        %v836 = vsub.f32 %v560, %v770
        %v837 = vsub.f32 %v673, %v770
        %v838 = vsub.f32 %v563, %v773
        %v839 = vsub.f32 %v676, %v773
        %v840 = vsub.f32 %v566, %v776
        %v841 = vsub.f32 %v679, %v776
        %v842 = vsub.f32 %v569, %v779
        %v843 = vsub.f32 %v682, %v779
        %v844 = vmul.f32 %v780, 1.442695
        %v845 = vpow.pop %v844
        %v846 = vmul.f32 %v781, 1.442695
        %v847 = vpow.pop %v846
        %v848 = vmul.f32 %v782, 1.442695
        %v849 = vpow.pop %v848
        %v850 = vmul.f32 %v783, 1.442695
        %v851 = vpow.pop %v850
        %v852 = vmul.f32 %v784, 1.442695
        %v853 = vpow.pop %v852
        %v854 = vmul.f32 %v785, 1.442695
        %v855 = vpow.pop %v854
        %v856 = vmul.f32 %v786, 1.442695
        %v857 = vpow.pop %v856
        %v858 = vmul.f32 %v787, 1.442695
        %v859 = vpow.pop %v858
        %v860 = vmul.f32 %v788, 1.442695
        %v861 = vpow.pop %v860
        %v862 = vmul.f32 %v789, 1.442695
        %v863 = vpow.pop %v862
        %v864 = vmul.f32 %v790, 1.442695
        %v865 = vpow.pop %v864
        %v866 = vmul.f32 %v791, 1.442695
        %v867 = vpow.pop %v866
        %v868 = vmul.f32 %v792, 1.442695
        %v869 = vpow.pop %v868
        %v870 = vmul.f32 %v793, 1.442695
        %v871 = vpow.pop %v870
        %v872 = vmul.f32 %v794, 1.442695
        %v873 = vpow.pop %v872
        %v874 = vmul.f32 %v795, 1.442695
        %v875 = vpow.pop %v874
        %v876 = vmul.f32 %v796, 1.442695
        %v877 = vpow.pop %v876
        %v878 = vmul.f32 %v797, 1.442695
        %v879 = vpow.pop %v878
        %v880 = vmul.f32 %v798, 1.442695
        %v881 = vpow.pop %v880
        %v882 = vmul.f32 %v799, 1.442695
        %v883 = vpow.pop %v882
        %v884 = vmul.f32 %v800, 1.442695
        %v885 = vpow.pop %v884
        %v886 = vmul.f32 %v801, 1.442695
        %v887 = vpow.pop %v886
        %v888 = vmul.f32 %v802, 1.442695
        %v889 = vpow.pop %v888
        %v890 = vmul.f32 %v803, 1.442695
        %v891 = vpow.pop %v890
        %v892 = vmul.f32 %v804, 1.442695
        %v893 = vpow.pop %v892
        %v894 = vmul.f32 %v805, 1.442695
        %v895 = vpow.pop %v894
        %v896 = vmul.f32 %v806, 1.442695
        %v897 = vpow.pop %v896
        %v898 = vmul.f32 %v807, 1.442695
        %v899 = vpow.pop %v898
        %v900 = vmul.f32 %v808, 1.442695
        %v901 = vpow.pop %v900
        %v902 = vmul.f32 %v809, 1.442695
        %v903 = vpow.pop %v902
        %v904 = vmul.f32 %v810, 1.442695
        %v905 = vpow.pop %v904
        %v906 = vmul.f32 %v811, 1.442695
        %v907 = vpow.pop %v906
        %v908 = vmul.f32 %v812, 1.442695
        %v909 = vpow.pop %v908
        %v910 = vmul.f32 %v813, 1.442695
        %v911 = vpow.pop %v910
        %v912 = vmul.f32 %v814, 1.442695
        %v913 = vpow.pop %v912
        %v914 = vmul.f32 %v815, 1.442695
        %v915 = vpow.pop %v914
        %v916 = vmul.f32 %v816, 1.442695
        %v917 = vpow.pop %v916
        %v918 = vmul.f32 %v817, 1.442695
        %v919 = vpow.pop %v918
        %v920 = vmul.f32 %v818, 1.442695
        %v921 = vpow.pop %v920
        %v922 = vmul.f32 %v819, 1.442695
        %v923 = vpow.pop %v922
        %v924 = vmul.f32 %v820, 1.442695
        %v925 = vpow.pop %v924
        %v926 = vmul.f32 %v821, 1.442695
        %v927 = vpow.pop %v926
        %v928 = vmul.f32 %v822, 1.442695
        %v929 = vpow.pop %v928
        %v930 = vmul.f32 %v823, 1.442695
        %v931 = vpow.pop %v930
        %v932 = vmul.f32 %v824, 1.442695
        %v933 = vpow.pop %v932
        %v934 = vmul.f32 %v825, 1.442695
        %v935 = vpow.pop %v934
        %v936 = vmul.f32 %v826, 1.442695
        %v937 = vpow.pop %v936
        %v938 = vmul.f32 %v827, 1.442695
        %v939 = vpow.pop %v938
        %v940 = vmul.f32 %v828, 1.442695
        %v941 = vpow.pop %v940
        %v942 = vmul.f32 %v829, 1.442695
        %v943 = vpow.pop %v942
        %v944 = vmul.f32 %v830, 1.442695
        %v945 = vpow.pop %v944
        %v946 = vmul.f32 %v831, 1.442695
        %v947 = vpow.pop %v946
        %v948 = vmul.f32 %v832, 1.442695
        %v949 = vpow.pop %v948
        %v950 = vmul.f32 %v833, 1.442695
        %v951 = vpow.pop %v950
        %v952 = vmul.f32 %v834, 1.442695
        %v953 = vpow.pop %v952
        %v954 = vmul.f32 %v835, 1.442695
        %v955 = vpow.pop %v954
        %v956 = vmul.f32 %v836, 1.442695
        %v957 = vpow.pop %v956
        %v958 = vmul.f32 %v837, 1.442695
        %v959 = vpow.pop %v958
        %v960 = vmul.f32 %v838, 1.442695
        %v961 = vpow.pop %v960
        %v962 = vmul.f32 %v839, 1.442695
        %v963 = vpow.pop %v962
        %v964 = vmul.f32 %v840, 1.442695
        %v965 = vpow.pop %v964
        %v966 = vmul.f32 %v841, 1.442695
        %v967 = vpow.pop %v966
        %v968 = vmul.f32 %v842, 1.442695
        %v969 = vpow.pop %v968
        %v970 = vmul.f32 %v843, 1.442695
        %v971 = vpow.pop %v970
        %v972 = vadd.f32 %v845, %v847
        %973 = vadd.xlane.f32.xlu0 %v972
        %v974 = vpop.xlane.xlu0 %973
        %v975 = vadd.f32 %v849, %v851
        %976 = vadd.xlane.f32.xlu0 %v975
        %v977 = vpop.xlane.xlu0 %976
        %v978 = vadd.f32 %v853, %v855
        %979 = vadd.xlane.f32.xlu0 %v978
        %v980 = vpop.xlane.xlu0 %979
        %v981 = vadd.f32 %v857, %v859
        %982 = vadd.xlane.f32.xlu0 %v981
        %v983 = vpop.xlane.xlu0 %982
        %v984 = vadd.f32 %v861, %v863
        %985 = vadd.xlane.f32.xlu0 %v984
        %v986 = vpop.xlane.xlu0 %985
        %v987 = vadd.f32 %v865, %v867
        %988 = vadd.xlane.f32.xlu0 %v987
        %v989 = vpop.xlane.xlu0 %988
        %v990 = vadd.f32 %v869, %v871
        %991 = vadd.xlane.f32.xlu0 %v990
        %v992 = vpop.xlane.xlu0 %991
        %v993 = vadd.f32 %v873, %v875
        %994 = vadd.xlane.f32.xlu0 %v993
        %v995 = vpop.xlane.xlu0 %994
        %v996 = vadd.f32 %v877, %v879
        %997 = vadd.xlane.f32.xlu0 %v996
        %v998 = vpop.xlane.xlu0 %997
        %v999 = vadd.f32 %v881, %v883
        %1000 = vadd.xlane.f32.xlu0 %v999
        %v1001 = vpop.xlane.xlu0 %1000
        %v1002 = vadd.f32 %v885, %v887
        %1003 = vadd.xlane.f32.xlu0 %v1002
        %v1004 = vpop.xlane.xlu0 %1003
        %v1005 = vadd.f32 %v889, %v891
        %1006 = vadd.xlane.f32.xlu0 %v1005
        %v1007 = vpop.xlane.xlu0 %1006
        %v1008 = vadd.f32 %v893, %v895
        %1009 = vadd.xlane.f32.xlu0 %v1008
        %v1010 = vpop.xlane.xlu0 %1009
        %v1011 = vadd.f32 %v897, %v899
        %1012 = vadd.xlane.f32.xlu0 %v1011
        %v1013 = vpop.xlane.xlu0 %1012
        %v1014 = vadd.f32 %v901, %v903
        %1015 = vadd.xlane.f32.xlu0 %v1014
        %v1016 = vpop.xlane.xlu0 %1015
        %v1017 = vadd.f32 %v905, %v907
        %1018 = vadd.xlane.f32.xlu0 %v1017
        %v1019 = vpop.xlane.xlu0 %1018
        %v1020 = vadd.f32 %v909, %v911
        %1021 = vadd.xlane.f32.xlu0 %v1020
        %v1022 = vpop.xlane.xlu0 %1021
        %v1023 = vadd.f32 %v913, %v915
        %1024 = vadd.xlane.f32.xlu0 %v1023
        %v1025 = vpop.xlane.xlu0 %1024
        %v1026 = vadd.f32 %v917, %v919
        %1027 = vadd.xlane.f32.xlu0 %v1026
        %v1028 = vpop.xlane.xlu0 %1027
        %v1029 = vadd.f32 %v921, %v923
        %1030 = vadd.xlane.f32.xlu0 %v1029
        %v1031 = vpop.xlane.xlu0 %1030
        %v1032 = vadd.f32 %v925, %v927
        %1033 = vadd.xlane.f32.xlu0 %v1032
        %v1034 = vpop.xlane.xlu0 %1033
        %v1035 = vadd.f32 %v929, %v931
        %1036 = vadd.xlane.f32.xlu0 %v1035
        %v1037 = vpop.xlane.xlu0 %1036
        %v1038 = vadd.f32 %v933, %v935
        %1039 = vadd.xlane.f32.xlu0 %v1038
        %v1040 = vpop.xlane.xlu0 %1039
        %v1041 = vadd.f32 %v937, %v939
        %1042 = vadd.xlane.f32.xlu0 %v1041
        %v1043 = vpop.xlane.xlu0 %1042
        %v1044 = vadd.f32 %v941, %v943
        %1045 = vadd.xlane.f32.xlu0 %v1044
        %v1046 = vpop.xlane.xlu0 %1045
        %v1047 = vadd.f32 %v945, %v947
        %1048 = vadd.xlane.f32.xlu0 %v1047
        %v1049 = vpop.xlane.xlu0 %1048
        %v1050 = vadd.f32 %v949, %v951
        %1051 = vadd.xlane.f32.xlu0 %v1050
        %v1052 = vpop.xlane.xlu0 %1051
        %v1053 = vadd.f32 %v953, %v955
        %1054 = vadd.xlane.f32.xlu0 %v1053
        %v1055 = vpop.xlane.xlu0 %1054
        %v1056 = vadd.f32 %v957, %v959
        %1057 = vadd.xlane.f32.xlu0 %v1056
        %v1058 = vpop.xlane.xlu0 %1057
        %v1059 = vadd.f32 %v961, %v963
        %1060 = vadd.xlane.f32.xlu0 %v1059
        %v1061 = vpop.xlane.xlu0 %1060
        %v1062 = vadd.f32 %v965, %v967
        %1063 = vadd.xlane.f32.xlu0 %v1062
        %v1064 = vpop.xlane.xlu0 %1063
        %v1065 = vadd.f32 %v969, %v971
        %1066 = vadd.xlane.f32.xlu0 %v1065
        %v1067 = vpop.xlane.xlu0 %1066
        %v1068 = vrcp.pop %v974
        %v1069 = vrcp.pop %v977
        %v1070 = vrcp.pop %v980
        %v1071 = vrcp.pop %v983
        %v1072 = vrcp.pop %v986
        %v1073 = vrcp.pop %v989
        %v1074 = vrcp.pop %v992
        %v1075 = vrcp.pop %v995
        %v1076 = vrcp.pop %v998
        %v1077 = vrcp.pop %v1001
        %v1078 = vrcp.pop %v1004
        %v1079 = vrcp.pop %v1007
        %v1080 = vrcp.pop %v1010
        %v1081 = vrcp.pop %v1013
        %v1082 = vrcp.pop %v1016
        %v1083 = vrcp.pop %v1019
        %v1084 = vrcp.pop %v1022
        %v1085 = vrcp.pop %v1025
        %v1086 = vrcp.pop %v1028
        %v1087 = vrcp.pop %v1031
        %v1088 = vrcp.pop %v1034
        %v1089 = vrcp.pop %v1037
        %v1090 = vrcp.pop %v1040
        %v1091 = vrcp.pop %v1043
        %v1092 = vrcp.pop %v1046
        %v1093 = vrcp.pop %v1049
        %v1094 = vrcp.pop %v1052
        %v1095 = vrcp.pop %v1055
        %v1096 = vrcp.pop %v1058
        %v1097 = vrcp.pop %v1061
        %v1098 = vrcp.pop %v1064
        %v1099 = vrcp.pop %v1067
        %v1100 = vmul.f32 %v974, %v1068
        %v1101 = vmul.f32 %v977, %v1069
        %v1102 = vmul.f32 %v980, %v1070
        %v1103 = vmul.f32 %v983, %v1071
        %v1104 = vmul.f32 %v986, %v1072
        %v1105 = vmul.f32 %v989, %v1073
        %v1106 = vmul.f32 %v992, %v1074
        %v1107 = vmul.f32 %v995, %v1075
        %v1108 = vmul.f32 %v998, %v1076
        %v1109 = vmul.f32 %v1001, %v1077
        %v1110 = vmul.f32 %v1004, %v1078
        %v1111 = vmul.f32 %v1007, %v1079
        %v1112 = vmul.f32 %v1010, %v1080
        %v1113 = vmul.f32 %v1013, %v1081
        %v1114 = vmul.f32 %v1016, %v1082
        %v1115 = vmul.f32 %v1019, %v1083
        %v1116 = vmul.f32 %v1022, %v1084
        %v1117 = vmul.f32 %v1025, %v1085
        %v1118 = vmul.f32 %v1028, %v1086
        %v1119 = vmul.f32 %v1031, %v1087
        %v1120 = vmul.f32 %v1034, %v1088
        %v1121 = vmul.f32 %v1037, %v1089
        %v1122 = vmul.f32 %v1040, %v1090
        %v1123 = vmul.f32 %v1043, %v1091
        %v1124 = vmul.f32 %v1046, %v1092
        %v1125 = vmul.f32 %v1049, %v1093
        %v1126 = vmul.f32 %v1052, %v1094
        %v1127 = vmul.f32 %v1055, %v1095
        %v1128 = vmul.f32 %v1058, %v1096
        %v1129 = vmul.f32 %v1061, %v1097
        %v1130 = vmul.f32 %v1064, %v1098
        %v1131 = vmul.f32 %v1067, %v1099
        %v1132 = vsub.f32 2.0, %v1100
        %v1133 = vsub.f32 2.0, %v1101
        %v1134 = vsub.f32 2.0, %v1102
        %v1135 = vsub.f32 2.0, %v1103
        %v1136 = vsub.f32 2.0, %v1104
        %v1137 = vsub.f32 2.0, %v1105
        %v1138 = vsub.f32 2.0, %v1106
        %v1139 = vsub.f32 2.0, %v1107
        %v1140 = vsub.f32 2.0, %v1108
        %v1141 = vsub.f32 2.0, %v1109
        %v1142 = vsub.f32 2.0, %v1110
        %v1143 = vsub.f32 2.0, %v1111
        %v1144 = vsub.f32 2.0, %v1112
        %v1145 = vsub.f32 2.0, %v1113
        %v1146 = vsub.f32 2.0, %v1114
        %v1147 = vsub.f32 2.0, %v1115
        %v1148 = vsub.f32 2.0, %v1116
        %v1149 = vsub.f32 2.0, %v1117
        %v1150 = vsub.f32 2.0, %v1118
        %v1151 = vsub.f32 2.0, %v1119
        %v1152 = vsub.f32 2.0, %v1120
        %v1153 = vsub.f32 2.0, %v1121
        %v1154 = vsub.f32 2.0, %v1122
        %v1155 = vsub.f32 2.0, %v1123
        %v1156 = vsub.f32 2.0, %v1124
        %v1157 = vsub.f32 2.0, %v1125
        %v1158 = vsub.f32 2.0, %v1126
        %v1159 = vsub.f32 2.0, %v1127
        %v1160 = vsub.f32 2.0, %v1128
        %v1161 = vsub.f32 2.0, %v1129
        %v1162 = vsub.f32 2.0, %v1130
        %v1163 = vsub.f32 2.0, %v1131
        %v1164 = vmul.f32 %v1068, %v1132
        %v1165 = vmul.f32 %v1069, %v1133
        %v1166 = vmul.f32 %v1070, %v1134
        %v1167 = vmul.f32 %v1071, %v1135
        %v1168 = vmul.f32 %v1072, %v1136
        %v1169 = vmul.f32 %v1073, %v1137
        %v1170 = vmul.f32 %v1074, %v1138
        %v1171 = vmul.f32 %v1075, %v1139
        %v1172 = vmul.f32 %v1076, %v1140
        %v1173 = vmul.f32 %v1077, %v1141
        %v1174 = vmul.f32 %v1078, %v1142
        %v1175 = vmul.f32 %v1079, %v1143
        %v1176 = vmul.f32 %v1080, %v1144
        %v1177 = vmul.f32 %v1081, %v1145
        %v1178 = vmul.f32 %v1082, %v1146
        %v1179 = vmul.f32 %v1083, %v1147
        %v1180 = vmul.f32 %v1084, %v1148
        %v1181 = vmul.f32 %v1085, %v1149
        %v1182 = vmul.f32 %v1086, %v1150
        %v1183 = vmul.f32 %v1087, %v1151
        %v1184 = vmul.f32 %v1088, %v1152
        %v1185 = vmul.f32 %v1089, %v1153
        %v1186 = vmul.f32 %v1090, %v1154
        %v1187 = vmul.f32 %v1091, %v1155
        %v1188 = vmul.f32 %v1092, %v1156
        %v1189 = vmul.f32 %v1093, %v1157
        %v1190 = vmul.f32 %v1094, %v1158
        %v1191 = vmul.f32 %v1095, %v1159
        %v1192 = vmul.f32 %v1096, %v1160
        %v1193 = vmul.f32 %v1097, %v1161
        %v1194 = vmul.f32 %v1098, %v1162
        %v1195 = vmul.f32 %v1099, %v1163
        %v1196 = vmul.f32 %v845, %v1164
        %v1197 = vmul.f32 %v847, %v1164
        %v1198 = vmul.f32 %v849, %v1165
        %v1199 = vmul.f32 %v851, %v1165
        %v1200 = vmul.f32 %v853, %v1166
        %v1201 = vmul.f32 %v855, %v1166
        %v1202 = vmul.f32 %v857, %v1167
        %v1203 = vmul.f32 %v859, %v1167
        %v1204 = vmul.f32 %v861, %v1168
        %v1205 = vmul.f32 %v863, %v1168
        %v1206 = vmul.f32 %v865, %v1169
        %v1207 = vmul.f32 %v867, %v1169
        %v1208 = vmul.f32 %v869, %v1170
        %v1209 = vmul.f32 %v871, %v1170
        %v1210 = vmul.f32 %v873, %v1171
        %v1211 = vmul.f32 %v875, %v1171
        %v1212 = vmul.f32 %v877, %v1172
        %v1213 = vmul.f32 %v879, %v1172
        %v1214 = vmul.f32 %v881, %v1173
        %v1215 = vmul.f32 %v883, %v1173
        %v1216 = vmul.f32 %v885, %v1174
        %v1217 = vmul.f32 %v887, %v1174
        %v1218 = vmul.f32 %v889, %v1175
        %v1219 = vmul.f32 %v891, %v1175
        %v1220 = vmul.f32 %v893, %v1176
        %v1221 = vmul.f32 %v895, %v1176
        %v1222 = vmul.f32 %v897, %v1177
        %v1223 = vmul.f32 %v899, %v1177
        %v1224 = vmul.f32 %v901, %v1178
        %v1225 = vmul.f32 %v903, %v1178
        %v1226 = vmul.f32 %v905, %v1179
        %v1227 = vmul.f32 %v907, %v1179
        %v1228 = vmul.f32 %v909, %v1180
        %v1229 = vmul.f32 %v911, %v1180
        %v1230 = vmul.f32 %v913, %v1181
        %v1231 = vmul.f32 %v915, %v1181
        %v1232 = vmul.f32 %v917, %v1182
        %v1233 = vmul.f32 %v919, %v1182
        %v1234 = vmul.f32 %v921, %v1183
        %v1235 = vmul.f32 %v923, %v1183
        %v1236 = vmul.f32 %v925, %v1184
        %v1237 = vmul.f32 %v927, %v1184
        %v1238 = vmul.f32 %v929, %v1185
        %v1239 = vmul.f32 %v931, %v1185
        %v1240 = vmul.f32 %v933, %v1186
        %v1241 = vmul.f32 %v935, %v1186
        %v1242 = vmul.f32 %v937, %v1187
        %v1243 = vmul.f32 %v939, %v1187
        %v1244 = vmul.f32 %v941, %v1188
        %v1245 = vmul.f32 %v943, %v1188
        %v1246 = vmul.f32 %v945, %v1189
        %v1247 = vmul.f32 %v947, %v1189
        %v1248 = vmul.f32 %v949, %v1190
        %v1249 = vmul.f32 %v951, %v1190
        %v1250 = vmul.f32 %v953, %v1191
        %v1251 = vmul.f32 %v955, %v1191
        %v1252 = vmul.f32 %v957, %v1192
        %v1253 = vmul.f32 %v959, %v1192
        %v1254 = vmul.f32 %v961, %v1193
        %v1255 = vmul.f32 %v963, %v1193
        %v1256 = vmul.f32 %v965, %v1194
        %v1257 = vmul.f32 %v967, %v1194
        %v1258 = vmul.f32 %v969, %v1195
        %v1259 = vmul.f32 %v971, %v1195
        %1260 = vst [vmem:[%s223] sm:$0xff] %v1196
        %1261 = vst [vmem:[%s223 + $0x8] sm:$0xff] %v1197
        %1262 = vst [vmem:[%s223 + $0x10] sm:$0xff] %v1198
        %1263 = vst [vmem:[%s223 + $0x18] sm:$0xff] %v1199
        %1264 = vst [vmem:[%s223 + $0x20] sm:$0xff] %v1200
        %1265 = vst [vmem:[%s223 + $0x28] sm:$0xff] %v1201
        %1266 = vst [vmem:[%s223 + $0x30] sm:$0xff] %v1202
        %1267 = vst [vmem:[%s223 + $0x38] sm:$0xff] %v1203
        %1268 = vst [vmem:[%s223 + $0x40] sm:$0xff] %v1204
        %1269 = vst [vmem:[%s223 + $0x48] sm:$0xff] %v1205
        %1270 = vst [vmem:[%s223 + $0x50] sm:$0xff] %v1206
        %1271 = vst [vmem:[%s223 + $0x58] sm:$0xff] %v1207
        %1272 = vst [vmem:[%s223 + $0x60] sm:$0xff] %v1208
        %1273 = vst [vmem:[%s223 + $0x68] sm:$0xff] %v1209
        %1274 = vst [vmem:[%s223 + $0x70] sm:$0xff] %v1210
        %1275 = vst [vmem:[%s223 + $0x78] sm:$0xff] %v1211
        %1276 = vst [vmem:[%s223 + $0x80] sm:$0xff] %v1212
        %1277 = vst [vmem:[%s223 + $0x88] sm:$0xff] %v1213
        %1278 = vst [vmem:[%s223 + $0x90] sm:$0xff] %v1214
        %1279 = vst [vmem:[%s223 + $0x98] sm:$0xff] %v1215
        %1280 = vst [vmem:[%s223 + $0xa0] sm:$0xff] %v1216
        %1281 = vst [vmem:[%s223 + $0xa8] sm:$0xff] %v1217
        %1282 = vst [vmem:[%s223 + $0xb0] sm:$0xff] %v1218
        %1283 = vst [vmem:[%s223 + $0xb8] sm:$0xff] %v1219
        %1284 = vst [vmem:[%s223 + $0xc0] sm:$0xff] %v1220
        %1285 = vst [vmem:[%s223 + $0xc8] sm:$0xff] %v1221
        %1286 = vst [vmem:[%s223 + $0xd0] sm:$0xff] %v1222
        %1287 = vst [vmem:[%s223 + $0xd8] sm:$0xff] %v1223
        %1288 = vst [vmem:[%s223 + $0xe0] sm:$0xff] %v1224
        %1289 = vst [vmem:[%s223 + $0xe8] sm:$0xff] %v1225
        %1290 = vst [vmem:[%s223 + $0xf0] sm:$0xff] %v1226
        %1291 = vst [vmem:[%s223 + $0xf8] sm:$0xff] %v1227
        %1292 = vst [vmem:[%s223 + $0x100] sm:$0xff] %v1228
        %1293 = vst [vmem:[%s223 + $0x108] sm:$0xff] %v1229
        %1294 = vst [vmem:[%s223 + $0x110] sm:$0xff] %v1230
        %1295 = vst [vmem:[%s223 + $0x118] sm:$0xff] %v1231
        %1296 = vst [vmem:[%s223 + $0x120] sm:$0xff] %v1232
        %1297 = vst [vmem:[%s223 + $0x128] sm:$0xff] %v1233
        %1298 = vst [vmem:[%s223 + $0x130] sm:$0xff] %v1234
        %1299 = vst [vmem:[%s223 + $0x138] sm:$0xff] %v1235
        %1300 = vst [vmem:[%s223 + $0x140] sm:$0xff] %v1236
        %1301 = vst [vmem:[%s223 + $0x148] sm:$0xff] %v1237
        %1302 = vst [vmem:[%s223 + $0x150] sm:$0xff] %v1238
        %1303 = vst [vmem:[%s223 + $0x158] sm:$0xff] %v1239
        %1304 = vst [vmem:[%s223 + $0x160] sm:$0xff] %v1240
        %1305 = vst [vmem:[%s223 + $0x168] sm:$0xff] %v1241
        %1306 = vst [vmem:[%s223 + $0x170] sm:$0xff] %v1242
        %1307 = vst [vmem:[%s223 + $0x178] sm:$0xff] %v1243
        %1308 = vst [vmem:[%s223 + $0x180] sm:$0xff] %v1244
        %1309 = vst [vmem:[%s223 + $0x188] sm:$0xff] %v1245
        %1310 = vst [vmem:[%s223 + $0x190] sm:$0xff] %v1246
        %1311 = vst [vmem:[%s223 + $0x198] sm:$0xff] %v1247
        %1312 = vst [vmem:[%s223 + $0x1a0] sm:$0xff] %v1248
        %1313 = vst [vmem:[%s223 + $0x1a8] sm:$0xff] %v1249
        %1314 = vst [vmem:[%s223 + $0x1b0] sm:$0xff] %v1250
        %1315 = vst [vmem:[%s223 + $0x1b8] sm:$0xff] %v1251
        %1316 = vst [vmem:[%s223 + $0x1c0] sm:$0xff] %v1252
        %1317 = vst [vmem:[%s223 + $0x1c8] sm:$0xff] %v1253
        %1318 = vst [vmem:[%s223 + $0x1d0] sm:$0xff] %v1254
        %1319 = vst [vmem:[%s223 + $0x1d8] sm:$0xff] %v1255
        %1320 = vst [vmem:[%s223 + $0x1e0] sm:$0xff] %v1256
        %1321 = vst [vmem:[%s223 + $0x1e8] sm:$0xff] %v1257
        %1322 = vst [vmem:[%s223 + $0x1f0] sm:$0xff] %v1258
        %1323 = vst [vmem:[%s223 + $0x1f8] sm:$0xff] %v1259
        %s1324 = sand.u32 %s105, 1
        %s1325 = scalar_lea.sflag [#allocation4], %s1324
        %s1326 = sand.u32 %s105, 1
        %s1327 = smul.addr %s1326, 512
        %s1328 = scalar_lea.vmem [#allocation7], %s1327
        // Predicated region
        $region37: #{tpu_custom_call.1} parent=27 // pred_check
          %p1329 = pneg %p115
        $region38: #{tpu_custom_call.1} parent=27 // pred_check_branch
          %1331 = sbr.rel (%p1329) target = $region40
        $region39: #{tpu_custom_call.1} parent=27 // pred_region
          %s1332 = smul.u32 32, %s29
          %1334 = vsyncadd %s1325, 0
          %s1335 = smul.addr %s1332, 2
          %s1336 = smul.addr %s28, 64
          %s1337 = sadd.s32 %s1335, %s1336
          %s1338 = smul.addr %s27, 256
          %s1339 = sadd.s32 %s1337, %s1338
          %s1340 = smul.addr %s1339, 8
          %s1341 = scalar_lea.hbm %s2, %s1340
          %s1342 = sshll.u32 %s1328, 4
          %s1343 = int_to_ptr.vmem [resolvable:$true] %s1342
          %s1344 = sshll.u32 %s1341, 4
          %s1345 = int_to_ptr.hbm [resolvable:$true] %s1344
          %1350 = dma.vmem_to_hbm [thread:$0]  %s1343, 8192, %s1345, %s1325, 256, 256, 16
        $region40: #{tpu_custom_call.1} parent=27 // pred_fallthru
          _
      $region28: #{tpu_custom_call.1} parent=5 // pred_fallthru
        _
      %p1351 = scmp.le.s32.totalorder 2, %s17
      // Predicated region
      $region41: #{tpu_custom_call.1} parent=5 // pred_check
        %p1352 = pneg %p1351
      $region42: #{tpu_custom_call.1} parent=5 // pred_check_branch
        %1354 = sbr.rel (%p1352) target = $region44
      $region43: #{tpu_custom_call.1} parent=5 // pred_region
        %s1355 = ssub.s32 %s17, 2
        // Predicated region
        $region45: #{tpu_custom_call.1} parent=43 // pred_check
          %p1356 = pneg %p121
        $region46: #{tpu_custom_call.1} parent=43 // pred_check_branch
          %1358 = sbr.rel (%p1356) target = $region48
        $region47: #{tpu_custom_call.1} parent=43 // pred_region
          %s1359 = sand.u32 %s106, 1
          %s1360 = scalar_lea.sflag [#allocation4], %s1359
          %s1361 = sand.u32 %s106, 1
          %s1362 = smul.addr %s1361, 512
          %s1363 = scalar_lea.vmem [#allocation7], %s1362
          %1365 = dma.done %s1360, 8192
        $region48: #{tpu_custom_call.1} parent=43 // pred_fallthru
          _
      $region44: #{tpu_custom_call.1} parent=5 // pred_fallthru
        _
    $region6: #{tpu_custom_call.1} parent=1 // loop_footer
      %s21 = sadd.s32 1, %s17
    $region7: #{tpu_custom_call.1} parent=1 // loop_footer_branch
      %16 = sbr.rel target = $region3
    $region8: #{tpu_custom_call.1} parent=1 // loop_exit
      _
    %1366 = vsyncpa [#allocation3], 1
    %s1367 = scalar_lea.sflag [#allocation3], 1
    %1368 = vsyncpa %s1367, 1
    %1369 = vsyncpa [#allocation6], 1
    %s1370 = scalar_lea.sflag [#allocation6], 1
    %1371 = vsyncpa %s1370, 1
    %1372 = vsyncpa [#allocation4], 1
    %s1373 = scalar_lea.sflag [#allocation4], 1
    %1374 = vsyncpa %s1373, 1

</llo_original>
